<compile_context>
chip_gen: v7x
topology: tpu7x:2x2x1
jax: 0.10.0
libtpu: 0.0.40
codegen_flags: <defaults>
</compile_context>

<pallas_src>
import functools

import jax
import jax.numpy as jnp
from jax import lax
from jax.experimental import pallas as pl
from jax.experimental.pallas import tpu as pltpu

_LANE = 512            # lane-dense last dim (multiple of 128)
_MAX_BLOCK_ROWS = 1024  # (1024, 512) f32 = 2 MiB per block


def _fmix32(z):
    """murmur3 finalizer: uint32 -> well-mixed uint32 (pure VPU integer ops)."""
    z = z ^ (z >> jnp.uint32(16))
    z = z * jnp.uint32(0x85EBCA6B)
    z = z ^ (z >> jnp.uint32(13))
    z = z * jnp.uint32(0xC2B2AE35)
    z = z ^ (z >> jnp.uint32(16))
    return z


def _hot_peaks_kernel(peak_ref, x_ref, o_ref, *, threshold_u32, seed_u32):
    block_rows, lane = x_ref.shape
    i = pl.program_id(0)

    x = x_ref[...]

    # Unique per-element counter across the whole slab (tile offset + 2D iota),
    # hashed to uniform uint32 bits.  Counter-based => deterministic, identical
    # on every backend, and uncorrelated between tiles.
    row = lax.broadcasted_iota(jnp.int32, (block_rows, lane), 0)
    col = lax.broadcasted_iota(jnp.int32, (block_rows, lane), 1)
    ctr = (i * block_rows + row) * lane + col
    bits = ctr.astype(jnp.uint32) ^ jnp.uint32(seed_u32)
    bits = _fmix32(bits)
    bits = _fmix32(bits + jnp.uint32(0x9E3779B9))

    # Integer-threshold Bernoulli:  uniform[0,1) > p  <=>  bits > p * 2^32.
    keep = bits > jnp.uint32(threshold_u32)
    o_ref[...] = jnp.where(keep, x, peak_ref[0])


def hot_peaks(img, *, peak_probability=0.1, distortion_factor=1.0, seed=0):
    """img: float array (any shape, e.g. NCHW). Returns same shape/dtype."""
    orig_shape = img.shape
    orig_dtype = img.dtype
    x = img.astype(jnp.float32)

    # Global reduction hoisted out of the kernel.
    xmax = jnp.max(x)
    xmin = jnp.min(x)
    peak_val = ((xmax - xmin) * jnp.float32(distortion_factor) + xmin).reshape(1)

    # Lane-dense slab: (rows, _LANE).
    total = x.size
    rows = pl.cdiv(total, _LANE)
    if rows <= _MAX_BLOCK_ROWS:
        block_rows = max(8, ((rows + 7) // 8) * 8)   # single block, 8-row aligned
    else:
        block_rows = _MAX_BLOCK_ROWS
    grid_rows = pl.cdiv(rows, block_rows)
    padded_rows = grid_rows * block_rows
    padded_total = padded_rows * _LANE

    flat = x.reshape(-1)
    if padded_total != total:
        flat = jnp.pad(flat, (0, padded_total - total))
    x2d = flat.reshape(padded_rows, _LANE)

    threshold_u32 = int(float(peak_probability) * float(1 << 32))
    threshold_u32 = min(max(threshold_u32, 0), (1 << 32) - 1)

    kernel = functools.partial(
        _hot_peaks_kernel,
        threshold_u32=threshold_u32,
        seed_u32=int(seed) & 0xFFFFFFFF,
    )

    out2d = pl.pallas_call(
        kernel,
        out_shape=jax.ShapeDtypeStruct(x2d.shape, jnp.float32),
        grid=(grid_rows,),
        in_specs=[
            pl.BlockSpec(memory_space=pltpu.MemorySpace.SMEM),    # peak_val scalar
            pl.BlockSpec((block_rows, _LANE), lambda i: (i, 0)),  # tiled input
        ],
        out_specs=pl.BlockSpec((block_rows, _LANE), lambda i: (i, 0)),
        compiler_params=pltpu.CompilerParams(
            dimension_semantics=("parallel",),
        ),
    )(peak_val, x2d)

    out = out2d.reshape(-1)[:total].reshape(orig_shape)
    return out.astype(orig_dtype)


if __name__ == "__main__":
    key = jax.random.PRNGKey(0)
    # Small NCHW input consistent with the module's forward (an "image").
    x = jax.random.normal(key, (2, 4, 16, 16), dtype=jnp.float32)

    out = hot_peaks(x, peak_probability=0.1, distortion_factor=1.0, seed=0)
    out = jax.block_until_ready(out)

    # Sanity checks: shape/dtype preserved; every element is either the
    # original value or the global peak value; replacement rate is sane.
    assert out.shape == x.shape and out.dtype == x.dtype
    peak_val = (x.max() - x.min()) * 1.0 + x.min()
    is_orig = jnp.isclose(out, x)
    is_peak = jnp.isclose(out, peak_val)
    assert bool(jnp.all(is_orig | is_peak))
    frac_replaced = float(jnp.mean((~is_orig).astype(jnp.float32)))
    assert 0.01 <= frac_replaced <= 0.4, frac_replaced

    print("KERNEL_OK")
</pallas_src>

<mosaic_0001>
module attributes {stable_mosaic.version = 11 : i64} {
  func.func @_hot_peaks_kernel(%arg0: i32, %arg1: memref<1xf32, #tpu.memory_space<smem>>, %arg2: memref<8x512xf32, #tpu.memory_space<vmem>>, %arg3: memref<8x512xf32, #tpu.memory_space<vmem>>) attributes {dimension_semantics = [#tpu.dimension_semantics<parallel>], iteration_bounds = array<i64: 1>, scalar_prefetch = 0 : i64, scratch_operands = 0 : i64, tpu.core_type = #tpu.core_type<tc>, window_params = [{transform_indices = @transform_0, window_bounds = array<i64: 1>}, {transform_indices = @transform_1, window_bounds = array<i64: 8, 512>}, {transform_indices = @transform_2, window_bounds = array<i64: 8, 512>}]} {
    %c0 = arith.constant 0 : index
    %c0_0 = arith.constant 0 : index
    %0 = vector.load %arg2[%c0, %c0_0] : memref<8x512xf32, #tpu.memory_space<vmem>>, vector<8x512xf32>
    %1 = tpu.iota {dimensions = array<i32: 0>} : vector<8x512xi32>
    %2 = tpu.iota {dimensions = array<i32: 1>} : vector<8x512xi32>
    %c8_i32 = arith.constant 8 : i32
    %3 = arith.muli %arg0, %c8_i32 : i32
    %4 = vector.broadcast %3 : i32 to vector<8x512xi32>
    %5 = arith.addi %4, %1 : vector<8x512xi32>
    %c512_i32 = arith.constant 512 : i32
    %6 = vector.broadcast %c512_i32 : i32 to vector<8x512xi32>
    %7 = arith.muli %5, %6 : vector<8x512xi32>
    %8 = arith.addi %7, %2 : vector<8x512xi32>
    %c0_i32 = arith.constant 0 : i32
    %9 = vector.broadcast %c0_i32 : i32 to vector<8x512xi32>
    %10 = arith.xori %8, %9 : vector<8x512xi32>
    %c16_i32 = arith.constant 16 : i32
    %11 = vector.broadcast %c16_i32 : i32 to vector<8x512xi32>
    %12 = arith.shrui %10, %11 : vector<8x512xi32>
    %13 = arith.xori %10, %12 : vector<8x512xi32>
    %c-2048144789_i32 = arith.constant -2048144789 : i32
    %14 = vector.broadcast %c-2048144789_i32 : i32 to vector<8x512xi32>
    %15 = arith.muli %13, %14 : vector<8x512xi32>
    %c13_i32 = arith.constant 13 : i32
    %16 = vector.broadcast %c13_i32 : i32 to vector<8x512xi32>
    %17 = arith.shrui %15, %16 : vector<8x512xi32>
    %18 = arith.xori %15, %17 : vector<8x512xi32>
    %c-1028477387_i32 = arith.constant -1028477387 : i32
    %19 = vector.broadcast %c-1028477387_i32 : i32 to vector<8x512xi32>
    %20 = arith.muli %18, %19 : vector<8x512xi32>
    %c16_i32_1 = arith.constant 16 : i32
    %21 = vector.broadcast %c16_i32_1 : i32 to vector<8x512xi32>
    %22 = arith.shrui %20, %21 : vector<8x512xi32>
    %23 = arith.xori %20, %22 : vector<8x512xi32>
    %c-1640531527_i32 = arith.constant -1640531527 : i32
    %24 = vector.broadcast %c-1640531527_i32 : i32 to vector<8x512xi32>
    %25 = arith.addi %23, %24 : vector<8x512xi32>
    %c16_i32_2 = arith.constant 16 : i32
    %26 = vector.broadcast %c16_i32_2 : i32 to vector<8x512xi32>
    %27 = arith.shrui %25, %26 : vector<8x512xi32>
    %28 = arith.xori %25, %27 : vector<8x512xi32>
    %c-2048144789_i32_3 = arith.constant -2048144789 : i32
    %29 = vector.broadcast %c-2048144789_i32_3 : i32 to vector<8x512xi32>
    %30 = arith.muli %28, %29 : vector<8x512xi32>
    %c13_i32_4 = arith.constant 13 : i32
    %31 = vector.broadcast %c13_i32_4 : i32 to vector<8x512xi32>
    %32 = arith.shrui %30, %31 : vector<8x512xi32>
    %33 = arith.xori %30, %32 : vector<8x512xi32>
    %c-1028477387_i32_5 = arith.constant -1028477387 : i32
    %34 = vector.broadcast %c-1028477387_i32_5 : i32 to vector<8x512xi32>
    %35 = arith.muli %33, %34 : vector<8x512xi32>
    %c16_i32_6 = arith.constant 16 : i32
    %36 = vector.broadcast %c16_i32_6 : i32 to vector<8x512xi32>
    %37 = arith.shrui %35, %36 : vector<8x512xi32>
    %38 = arith.xori %35, %37 : vector<8x512xi32>
    %c429496729_i32 = arith.constant 429496729 : i32
    %39 = vector.broadcast %c429496729_i32 : i32 to vector<8x512xi32>
    %40 = arith.cmpi ugt, %38, %39 : vector<8x512xi32>
    %c0_7 = arith.constant 0 : index
    %41 = memref.load %arg1[%c0_7] : memref<1xf32, #tpu.memory_space<smem>>
    %42 = vector.broadcast %41 : f32 to vector<8x512xf32>
    %43 = arith.select %40, %0, %42 : vector<8x512xi1>, vector<8x512xf32>
    %c0_8 = arith.constant 0 : index
    %c0_9 = arith.constant 0 : index
    %44 = vector.load %arg3[%c0_8, %c0_9] : memref<8x512xf32, #tpu.memory_space<vmem>>, vector<8x512xf32>
    tpu.vector_store %arg3[%c0_8, %c0_9], %43 {strides = array<i32>} : memref<8x512xf32, #tpu.memory_space<vmem>>, vector<8x512xf32>,
    return
  }
  func.func @transform_0(%arg0: i32) -> i32 {
    %c0_i32 = arith.constant 0 : i32
    %c0_i32_0 = arith.constant 0 : i32
    return %c0_i32 : i32
  }
  func.func @transform_1(%arg0: i32) -> (i32, i32) {
    %c0_i32 = arith.constant 0 : i32
    %c0_i32_0 = arith.constant 0 : i32
    return %arg0, %c0_i32 : i32, i32
  }
  func.func @transform_2(%arg0: i32) -> (i32, i32) {
    %c0_i32 = arith.constant 0 : i32
    %c0_i32_0 = arith.constant 0 : i32
    return %arg0, %c0_i32 : i32, i32
  }
}

</mosaic_0001>

<llo_original>
// kernel: tpu_custom_call.1
$region0: #{tpu_custom_call.1}
  #allocation0 [shape = 'u32[]', space=smem, size = 0x4, offset = 0x4, fixed_abs, tag = 'smem constant byte address 0x4 - core index']
  #allocation1 [shape = 'u32[144,128]{1,0:T(1,128)}', space=vmem, size = 0x12000, scoped, tag = 'internal scratch']
  #allocation2 [shape = 'f32[1]{0:T(128)S(6)}', space=smem, size = 0x200, scoped, tag = 'scoped memory for tpu_custom_call.1']
  %s0 = inlined_call_operand.<no memory space> [shape: f32[1], index: 0, kind: input, shape index: {}]
  %s1 = inlined_call_operand.hbm [shape: f32[8,512], index: 1, kind: input, shape index: {}]
  %s2 = inlined_call_operand.hbm [shape: f32[8,512], index: 2, kind: output, shape index: {}]
  %s3 = sld [smem:[#allocation0]]
  $region22: #{tpu_custom_call.1} parent=0
    _
  %s5 = ssub.s32 1, %s3
  %s6 = scalar_select 0, %s5, %s3
  %7 = sst [smem:[#allocation2]] %s0
  $region1: #{tpu_custom_call.1} parent=0
    #allocation3 [shape = 'u8[16384]{0}', space=vmem, size = 0x4000, scoped, tag = 'input window, operand 1, single buffered']
    #allocation4 [shape = 's32[1]{0}', space=sflag, size = 0x4, scoped, tag = 'scoped memory for tpu_custom_call.1']
    #allocation5 [shape = 's32[1]{0}', space=sflag, size = 0x4, scoped, tag = 'scoped memory for tpu_custom_call.1']
    #allocation6 [shape = 'u8[16384]{0}', space=vmem, size = 0x4000, scoped, tag = 'output window, operand 0, single buffered']
    %8 = vsyncpa [#allocation4], 0
    %9 = vsyncpa [#allocation5], 0
    // Predicated region
    $region2: #{tpu_custom_call.1} parent=1 // pred_check
      _
    $region3: #{tpu_custom_call.1} parent=1 // pred_check_branch
      %11 = sbr.rel (0) target = $region5
    $region4: #{tpu_custom_call.1} parent=1 // pred_region
      _
    $region5: #{tpu_custom_call.1} parent=1 // pred_fallthru
      _
    // Predicated region
    $region6: #{tpu_custom_call.1} parent=1 // pred_check
      _
    $region7: #{tpu_custom_call.1} parent=1 // pred_check_branch
      %13 = sbr.rel (0) target = $region9
    $region8: #{tpu_custom_call.1} parent=1 // pred_region
      %s15 = ssub.s32 512, 512
      %16 = vsyncadd [#allocation4], %s15
      %s18 = sshll.u32 [#allocation3], 4
      %s19 = int_to_ptr.vmem [resolvable:$true] %s18
      %21 = dma.hbm_to_vmem [thread:$0]  %s1, 512, %s19, [#allocation4]
    $region9: #{tpu_custom_call.1} parent=1 // pred_fallthru
      _
    // Predicated region
    $region10: #{tpu_custom_call.1} parent=1 // pred_check
      _
    $region11: #{tpu_custom_call.1} parent=1 // pred_check_branch
      %23 = sbr.rel (0) target = $region13
    $region12: #{tpu_custom_call.1} parent=1 // pred_region
      %24 = dma.done [#allocation4], 512
    $region13: #{tpu_custom_call.1} parent=1 // pred_fallthru
      _
    %v25 = vld [vmem:[#allocation3] sm:$0xff]
    %v26 = vld [vmem:[#allocation3 + $0x8] sm:$0xff]
    %v27 = vld [vmem:[#allocation3 + $0x10] sm:$0xff]
    %v28 = vld [vmem:[#allocation3 + $0x18] sm:$0xff]
    %v29 = vlaneseq
    %v30 = vshrl.u32 %v29, 7
    %v31 = vlaneseq
    %v32 = vand.u32 %v31, 127
    %v33 = vadd.s32 %v32, 128
    %v34 = vadd.s32 %v32, 256
    %v35 = vadd.s32 %v32, 384
    %s36 = smul.u32 0, 8
    %v37 = vstv %s36
    %v38 = vadd.s32 %v37, %v30
    %v39 = vmul.u32 %v38, 512
    %v40 = vadd.s32 %v39, %v32
    %v41 = vadd.s32 %v39, %v33
    %v42 = vadd.s32 %v39, %v34
    %v43 = vadd.s32 %v39, %v35
    %v44 = vshrl.u32 %v40, 16
    %v45 = vshrl.u32 %v41, 16
    %v46 = vshrl.u32 %v42, 16
    %v47 = vshrl.u32 %v43, 16
    %v48 = vxor.u32 %v40, %v44
    %v49 = vxor.u32 %v41, %v45
    %v50 = vxor.u32 %v42, %v46
    %v51 = vxor.u32 %v43, %v47
    %v52 = vmul.u32 %v48, 2246822507
    %v53 = vmul.u32 %v49, 2246822507
    %v54 = vmul.u32 %v50, 2246822507
    %v55 = vmul.u32 %v51, 2246822507
    %v56 = vshrl.u32 %v52, 13
    %v57 = vshrl.u32 %v53, 13
    %v58 = vshrl.u32 %v54, 13
    %v59 = vshrl.u32 %v55, 13
    %v60 = vxor.u32 %v52, %v56
    %v61 = vxor.u32 %v53, %v57
    %v62 = vxor.u32 %v54, %v58
    %v63 = vxor.u32 %v55, %v59
    %v64 = vmul.u32 %v60, 3266489909
    %v65 = vmul.u32 %v61, 3266489909
    %v66 = vmul.u32 %v62, 3266489909
    %v67 = vmul.u32 %v63, 3266489909
    %v68 = vshrl.u32 %v64, 16
    %v69 = vshrl.u32 %v65, 16
    %v70 = vshrl.u32 %v66, 16
    %v71 = vshrl.u32 %v67, 16
    %v72 = vxor.u32 %v64, %v68
    %v73 = vxor.u32 %v65, %v69
    %v74 = vxor.u32 %v66, %v70
    %v75 = vxor.u32 %v67, %v71
    %v76 = vadd.s32 %v72, 2654435769
    %v77 = vadd.s32 %v73, 2654435769
    %v78 = vadd.s32 %v74, 2654435769
    %v79 = vadd.s32 %v75, 2654435769
    %v80 = vshrl.u32 %v76, 16
    %v81 = vshrl.u32 %v77, 16
    %v82 = vshrl.u32 %v78, 16
    %v83 = vshrl.u32 %v79, 16
    %v84 = vxor.u32 %v76, %v80
    %v85 = vxor.u32 %v77, %v81
    %v86 = vxor.u32 %v78, %v82
    %v87 = vxor.u32 %v79, %v83
    %v88 = vmul.u32 %v84, 2246822507
    %v89 = vmul.u32 %v85, 2246822507
    %v90 = vmul.u32 %v86, 2246822507
    %v91 = vmul.u32 %v87, 2246822507
    %v92 = vshrl.u32 %v88, 13
    %v93 = vshrl.u32 %v89, 13
    %v94 = vshrl.u32 %v90, 13
    %v95 = vshrl.u32 %v91, 13
    %v96 = vxor.u32 %v88, %v92
    %v97 = vxor.u32 %v89, %v93
    %v98 = vxor.u32 %v90, %v94
    %v99 = vxor.u32 %v91, %v95
    %v100 = vmul.u32 %v96, 3266489909
    %v101 = vmul.u32 %v97, 3266489909
    %v102 = vmul.u32 %v98, 3266489909
    %v103 = vmul.u32 %v99, 3266489909
    %v104 = vshrl.u32 %v100, 16
    %v105 = vshrl.u32 %v101, 16
    %v106 = vshrl.u32 %v102, 16
    %v107 = vshrl.u32 %v103, 16
    %v108 = vxor.u32 %v100, %v104
    %v109 = vxor.u32 %v101, %v105
    %v110 = vxor.u32 %v102, %v106
    %v111 = vxor.u32 %v103, %v107
    %vm112 = vcmp.gt.u32.totalorder %v108, 429496729
    %vm113 = vcmp.gt.u32.totalorder %v109, 429496729
    %vm114 = vcmp.gt.u32.totalorder %v110, 429496729
    %vm115 = vcmp.gt.u32.totalorder %v111, 429496729
    %s116 = sld [smem:[#allocation2]]
    %v117 = vstv %s116
    %v118 = vsel %vm112, %v25, %v117
    %v119 = vsel %vm113, %v26, %v117
    %v120 = vsel %vm114, %v27, %v117
    %v121 = vsel %vm115, %v28, %v117
    %122 = vst [vmem:[#allocation6] sm:$0xff] %v118
    %123 = vst [vmem:[#allocation6 + $0x8] sm:$0xff] %v119
    %124 = vst [vmem:[#allocation6 + $0x10] sm:$0xff] %v120
    %125 = vst [vmem:[#allocation6 + $0x18] sm:$0xff] %v121
    // Predicated region
    $region14: #{tpu_custom_call.1} parent=1 // pred_check
      _
    $region15: #{tpu_custom_call.1} parent=1 // pred_check_branch
      %127 = sbr.rel (0) target = $region17
    $region16: #{tpu_custom_call.1} parent=1 // pred_region
      %s129 = ssub.s32 512, 512
      %130 = vsyncadd [#allocation5], %s129
      %s132 = sshll.u32 [#allocation6], 4
      %s133 = int_to_ptr.vmem [resolvable:$true] %s132
      %135 = dma.vmem_to_hbm [thread:$0]  %s133, 512, %s2, [#allocation5]
    $region17: #{tpu_custom_call.1} parent=1 // pred_fallthru
      _
    // Predicated region
    $region18: #{tpu_custom_call.1} parent=1 // pred_check
      _
    $region19: #{tpu_custom_call.1} parent=1 // pred_check_branch
      %137 = sbr.rel (0) target = $region21
    $region20: #{tpu_custom_call.1} parent=1 // pred_region
      %138 = dma.done [#allocation5], 512
    $region21: #{tpu_custom_call.1} parent=1 // pred_fallthru
      _
    %139 = vsyncpa [#allocation4], 1
    %140 = vsyncpa [#allocation5], 1

</llo_original>
